<compile_context>
chip_gen: v6e
topology: v6e:2x2x1
jax: 0.10.0
libtpu: 0.0.40
codegen_flags: <defaults>
</compile_context>

<pallas_src>
import numpy as np
import jax
import jax.numpy as jnp
from jax.experimental import pallas as pl
from jax.experimental.pallas import tpu as pltpu


def _round_up(a, b):
    return -(-a // b) * b


# ---------------------------------------------------------------------------
# Tiny dense matrices for adaptive average pooling / bilinear interpolation
# (built in numpy at trace time: h, w, sizes are static)
# ---------------------------------------------------------------------------
def _adaptive_pool_matrix_np(in_size, out_size):
    """P (out,in): PyTorch AdaptiveAvgPool2d semantics along one axis."""
    P = np.zeros((out_size, in_size), dtype=np.float32)
    for i in range(out_size):
        lo = (i * in_size) // out_size
        hi = int(np.ceil((i + 1) * in_size / out_size))
        P[i, lo:hi] = 1.0 / (hi - lo)
    return P


def _bilinear_matrix_np(in_size, out_size):
    """R (out,in): F.interpolate(mode='bilinear', align_corners=False), one axis."""
    R = np.zeros((out_size, in_size), dtype=np.float32)
    scale = in_size / out_size
    for i in range(out_size):
        pos = max((i + 0.5) * scale - 0.5, 0.0)
        i0 = min(int(np.floor(pos)), in_size - 1)
        i1 = min(i0 + 1, in_size - 1)
        frac = pos - i0
        R[i, i0] += 1.0 - frac
        R[i, i1] += frac
    return R


def _interp_matrix_t_np(h, w, sizes):
    """U^T (sum(s^2), h*w): bilinear-upsample weights of ALL pyramid stages.

    Column m = hh*w + ww.  Shared by every image in the batch (no
    kron(eye(N), .) block-diagonal blow-up).  Rows of each stage block sum to 1
    along the column axis' inverse map, so the BN shift folds exactly in f32.
    """
    blocks = []
    for s in sizes:
        Rh = _bilinear_matrix_np(s, h)                     # (h, s)
        Rw = _bilinear_matrix_np(s, w)                     # (w, s)
        blocks.append(np.einsum("hp,wq->pqhw", Rh, Rw).reshape(s * s, h * w))
    return np.concatenate(blocks, axis=0)                  # (kp, h*w)


# ---------------------------------------------------------------------------
# Pallas kernel: out = ReLU( WxT @ x_tile + ZT @ UT_tile + shift )
# ---------------------------------------------------------------------------
def _psp_kernel(x_ref, ut_ref, wxt_ref, zt_ref, shift_ref, o_ref):
    # x_ref   : (C , TM) f32  activation tile in native NCHW layout
    # ut_ref  : (KP, TM) f32  shared bilinear-upsample weights
    # wxt_ref : (F , C ) bf16 folded identity-branch bottleneck weight
    # zt_ref  : (F , KP) f32  folded pooled priors of the current image
    # shift   : (F , 1 ) f32  folded BN shift
    x_bf = x_ref[...].astype(jnp.bfloat16)       # cast in VMEM (no HBM pre-pass)
    acc = jnp.dot(wxt_ref[...], x_bf, preferred_element_type=jnp.float32)  # (F,TM)
    acc = acc + jnp.dot(zt_ref[...], ut_ref[...],
                        preferred_element_type=jnp.float32)                # (F,TM)
    o_ref[...] = jnp.maximum(acc + shift_ref[...], 0.0).astype(o_ref.dtype)


def _psp_pallas(x3, ut, wxt, zt, shift, tm):
    n, c, hw = x3.shape
    kp = ut.shape[0]
    f = wxt.shape[0]
    grid = (n, hw // tm)

    # actual per-step VMEM footprint (double-buffered), with headroom;
    # stays well under the 64 MiB/TC physical limit of v7x.
    vmem_need = (2 * c * tm * 4 + 2 * kp * tm * 4 + 2 * f * c * 2
                 + 2 * f * kp * 4 + 2 * f * 4 + 2 * f * tm * 4)
    vmem_limit = int(min(max(2 * vmem_need + (2 << 20), 16 << 20), 48 << 20))

    cost = pl.CostEstimate(
        flops=2 * n * hw * (c + kp) * f,
        transcendentals=0,
        bytes_accessed=(n * c * hw * 4 + n * kp * hw * 4 + f * c * 2
                        + n * f * kp * 4 + f * 4 + n * f * hw * 4),
    )

    return pl.pallas_call(
        _psp_kernel,
        out_shape=jax.ShapeDtypeStruct((n, f, hw), jnp.float32),
        grid=grid,
        in_specs=[
            pl.BlockSpec((None, c, tm), lambda b, i: (b, 0, i)),   # x row tile
            pl.BlockSpec((kp, tm), lambda b, i: (0, i)),           # shared U^T tile
            pl.BlockSpec((f, c), lambda b, i: (0, 0)),             # folded weight
            pl.BlockSpec((None, f, kp), lambda b, i: (b, 0, 0)),   # per-image Z^T
            pl.BlockSpec((f, 1), lambda b, i: (0, 0)),             # folded shift
        ],
        out_specs=pl.BlockSpec((None, f, tm), lambda b, i: (b, 0, i)),
        compiler_params=pltpu.CompilerParams(
            dimension_semantics=("parallel", "parallel"),
            vmem_limit_bytes=vmem_limit,
        ),
        cost_estimate=cost,
    )(x3, ut, wxt, zt, shift)


def _choose_row_tile(hw, n):
    """(tm, hw_pad): tm a multiple of 128 (lane-dense x/U/out tiles), <= 512,
    targeting >= 4 total grid steps (batch axis x row tiles) so each v7x
    TensorCore gets >= 2 steps and v5e/v6e can pipeline the DMA."""
    hw_pad = _round_up(hw, 128)
    want_row_steps = max(1, -(-4 // max(n, 1)))
    tm = min(512, max(128, _round_up(-(-hw_pad // want_row_steps), 128)))
    hw_pad = _round_up(hw_pad, tm)
    return tm, hw_pad


# ---------------------------------------------------------------------------
# Module forward (fused) and a plain-XLA reference for validation
# ---------------------------------------------------------------------------
def psp_module(x_nchw, params):
    """PSPModule forward (eval mode): (N, C, H, W) f32 -> (N, out_chans, H, W) f32."""
    sizes = params["sizes"]
    fpn = params["out_chans"]
    x = x_nchw.astype(jnp.float32)
    n, c, h, w = x.shape
    hw = h * w

    # Fold bottleneck BN scale into its weight columns; split rows into the
    # per-prior blocks and the identity (x) block (cat order: priors..., x).
    bott = params["bottleneck"]
    wb = bott["w"] * bott["scale"][None, :]                  # (c + S*fpn, fpn)
    wbx = wb[len(sizes) * fpn:, :]                           # (c, fpn) identity rows
    shift = bott["shift"]

    # TODO(synk): fold the tiny per-stage adaptive-average-pool reductions into
    # a first Pallas grid pass instead of these small XLA einsums.
    zt_blocks = []
    for si, (s, stage) in enumerate(zip(sizes, params["stages"])):
        wb_s = wb[si * fpn:(si + 1) * fpn, :]                # bottleneck rows of prior si
        w_eff = (stage["w"] * stage["scale"][None, :]) @ wb_s            # (c, fpn)
        shift = shift + stage["shift"] @ wb_s                # resize rows sum to 1
        Ph = jnp.asarray(_adaptive_pool_matrix_np(h, s))
        Pw = jnp.asarray(_adaptive_pool_matrix_np(w, s))
        pooled = jnp.einsum("ph,nchw,qw->npqc", Ph, x, Pw).reshape(n, s * s, c)
        zt_blocks.append(jnp.einsum("nkc,cf->nfk", pooled, w_eff))       # (n,fpn,s*s)
    zt = jnp.concatenate(zt_blocks, axis=2)                  # (n, fpn, kp)

    ut = _interp_matrix_t_np(h, w, sizes)                    # (kp, hw) numpy f32
    kp = ut.shape[0]
    kp_pad = _round_up(kp, 8)
    tm, hw_pad = _choose_row_tile(hw, n)

    if kp_pad != kp:                                         # sublane-friendly K
        ut = np.pad(ut, ((0, kp_pad - kp), (0, 0)))
        zt = jnp.pad(zt, ((0, 0), (0, 0), (0, kp_pad - kp)))
    if hw_pad != hw:
        ut = np.pad(ut, ((0, 0), (0, hw_pad - hw)))

    x3 = x.reshape(n, c, hw)                                 # native layout, no transpose
    if hw_pad != hw:
        x3 = jnp.pad(x3, ((0, 0), (0, 0), (0, hw_pad - hw)))

    out = _psp_pallas(
        x3,                                                  # f32, cast to bf16 in-kernel
        jnp.asarray(ut),                                     # f32 (exact row-sum == 1)
        jnp.transpose(wbx).astype(jnp.bfloat16),             # (fpn, c) bf16 for the MXU
        zt.astype(jnp.float32),                              # (n, fpn, kp) f32
        shift.reshape(fpn, 1).astype(jnp.float32),
        tm)

    if hw_pad != hw:
        out = out[:, :, :hw]
    return out.reshape(n, fpn, h, w)                         # already NCHW


def psp_reference(x_nchw, params):
    """Plain-XLA f32 reference (unfused) of the same eval-mode forward."""
    x = jnp.transpose(x_nchw, (0, 2, 3, 1)).astype(jnp.float32)
    n, h, w, c = x.shape
    priors = []
    for s, stage in zip(params["sizes"], params["stages"]):
        Ph = jnp.asarray(_adaptive_pool_matrix_np(h, s))
        Pw = jnp.asarray(_adaptive_pool_matrix_np(w, s))
        pooled = jnp.einsum("ph,nhwc,qw->npqc", Ph, x, Pw)
        y = (pooled @ stage["w"]) * stage["scale"] + stage["shift"]
        Rh = jnp.asarray(_bilinear_matrix_np(s, h))
        Rw = jnp.asarray(_bilinear_matrix_np(s, w))
        priors.append(jnp.einsum("hp,npqc,wq->nhwc", Rh, y, Rw))
    cat = jnp.concatenate(priors + [x], axis=-1)
    b = params["bottleneck"]
    out = jnp.maximum((cat @ b["w"]) * b["scale"] + b["shift"], 0.0)
    # Dropout2d(0.1) is identity in eval mode.
    return jnp.transpose(out, (0, 3, 1, 2))


# ---------------------------------------------------------------------------
# Deterministic synthetic parameters (Conv2d 1x1 no bias + BatchNorm2d, eval)
# ---------------------------------------------------------------------------
def _conv_bn_params(key, cin, cout):
    kw_, kg, kb, km, kv = jax.random.split(key, 5)
    eps = 1e-5
    w = jax.random.normal(kw_, (cin, cout), jnp.float32) / np.sqrt(cin)
    gamma = 1.0 + 0.1 * jax.random.normal(kg, (cout,), jnp.float32)
    beta = 0.1 * jax.random.normal(kb, (cout,), jnp.float32)
    running_mean = 0.1 * jax.random.normal(km, (cout,), jnp.float32)
    running_var = 1.0 + 0.5 * jax.random.uniform(kv, (cout,), jnp.float32)
    scale = gamma / jnp.sqrt(running_var + eps)      # general eval-mode BN fold
    shift = beta - scale * running_mean              # conv has no bias
    return {"w": w, "scale": scale, "shift": shift}


def init_params(key, in_chans, out_chans, sizes=(1, 2, 3, 6)):
    keys = jax.random.split(key, len(sizes) + 1)
    return {
        "sizes": tuple(sizes),
        "out_chans": out_chans,
        "stages": [_conv_bn_params(k, in_chans, out_chans) for k in keys[:-1]],
        "bottleneck": _conv_bn_params(
            keys[-1], in_chans + len(sizes) * out_chans, out_chans),
    }


# ---------------------------------------------------------------------------
if __name__ == "__main__":
    key = jax.random.PRNGKey(0)
    k_par, k_x = jax.random.split(key)

    in_chans, out_chans = 32, 32
    params = init_params(k_par, in_chans, out_chans, sizes=(1, 2, 3, 6))
    x = jax.random.normal(k_x, (2, in_chans, 16, 16), jnp.float32)

    out = jax.block_until_ready(psp_module(x, params))
    assert out.shape == (2, out_chans, 16, 16), out.shape
    assert bool(jnp.all(jnp.isfinite(out)))

    # sanity-check the fused mixed-precision Pallas path against the f32 reference
    ref = jax.block_until_ready(psp_reference(x, params))
    err = float(jnp.max(jnp.abs(out - ref)))
    assert err < 8e-2, f"max abs err {err}"
    print("KERNEL_OK")
</pallas_src>

<mosaic_0001>
module attributes {stable_mosaic.version = 11 : i64} {
  func.func @_psp_kernel(%arg0: i32, %arg1: i32, %arg2: memref<1x32x128xf32, #tpu.memory_space<vmem>>, %arg3: memref<56x128xf32, #tpu.memory_space<vmem>>, %arg4: memref<32x32xbf16, #tpu.memory_space<vmem>>, %arg5: memref<1x32x56xf32, #tpu.memory_space<vmem>>, %arg6: memref<32x1xf32, #tpu.memory_space<vmem>>, %arg7: memref<1x32x128xf32, #tpu.memory_space<vmem>>) attributes {dimension_semantics = [#tpu.dimension_semantics<parallel>, #tpu.dimension_semantics<parallel>], iteration_bounds = array<i64: 2, 2>, scalar_prefetch = 0 : i64, scratch_operands = 0 : i64, tpu.core_type = #tpu.core_type<tc>, window_params = [{transform_indices = @transform_0, window_bounds = array<i64: 1, 32, 128>}, {transform_indices = @transform_1, window_bounds = array<i64: 56, 128>}, {pipeline_mode = #tpu.pipeline_mode<synchronous>, transform_indices = @transform_2, window_bounds = array<i64: 32, 32>}, {transform_indices = @transform_3, window_bounds = array<i64: 1, 32, 56>}, {pipeline_mode = #tpu.pipeline_mode<synchronous>, transform_indices = @transform_4, window_bounds = array<i64: 32, 1>}, {transform_indices = @transform_5, window_bounds = array<i64: 1, 32, 128>}]} {
    %c0 = arith.constant 0 : index
    %c0_0 = arith.constant 0 : index
    %c0_1 = arith.constant 0 : index
    %0 = vector.load %arg2[%c0, %c0_0, %c0_1] : memref<1x32x128xf32, #tpu.memory_space<vmem>>, vector<1x32x128xf32>
    %1 = vector.shape_cast %0 : vector<1x32x128xf32> to vector<32x128xf32>
    %2 = arith.truncf %1 : vector<32x128xf32> to vector<32x128xbf16>
    %c0_2 = arith.constant 0 : index
    %c0_3 = arith.constant 0 : index
    %3 = vector.load %arg4[%c0_2, %c0_3] : memref<32x32xbf16, #tpu.memory_space<vmem>>, vector<32x32xbf16>
    %cst = arith.constant dense<0.000000e+00> : vector<32x128xf32>
    %4 = tpu.matmul %3, %2, %cst {dimension_numbers = #tpu.dot_dimension_numbers<[1], [0], [0], [1], [0, 0, 1, 1], [], []>} : vector<32x32xbf16>, vector<32x128xbf16>, vector<32x128xf32> -> vector<32x128xf32>
    %c0_4 = arith.constant 0 : index
    %c0_5 = arith.constant 0 : index
    %c0_6 = arith.constant 0 : index
    %5 = vector.load %arg5[%c0_4, %c0_5, %c0_6] : memref<1x32x56xf32, #tpu.memory_space<vmem>>, vector<1x32x56xf32>
    %6 = vector.shape_cast %5 : vector<1x32x56xf32> to vector<32x56xf32>
    %c0_7 = arith.constant 0 : index
    %c0_8 = arith.constant 0 : index
    %7 = vector.load %arg3[%c0_7, %c0_8] : memref<56x128xf32, #tpu.memory_space<vmem>>, vector<56x128xf32>
    %cst_9 = arith.constant dense<0.000000e+00> : vector<32x128xf32>
    %8 = tpu.matmul %6, %7, %cst_9 {dimension_numbers = #tpu.dot_dimension_numbers<[1], [0], [0], [1], [0, 0, 1, 1], [], []>} : vector<32x56xf32>, vector<56x128xf32>, vector<32x128xf32> -> vector<32x128xf32>
    %9 = arith.addf %4, %8 : vector<32x128xf32>
    %c0_10 = arith.constant 0 : index
    %c0_11 = arith.constant 0 : index
    %10 = vector.load %arg6[%c0_10, %c0_11] : memref<32x1xf32, #tpu.memory_space<vmem>>, vector<32x1xf32>
    %11 = vector.broadcast %10 : vector<32x1xf32> to vector<32x128xf32>
    %12 = arith.addf %9, %11 : vector<32x128xf32>
    %cst_12 = arith.constant 0.000000e+00 : f32
    %13 = vector.broadcast %cst_12 : f32 to vector<32x128xf32>
    %14 = arith.maximumf %12, %13 : vector<32x128xf32>
    %c0_13 = arith.constant 0 : index
    %c0_14 = arith.constant 0 : index
    %c0_15 = arith.constant 0 : index
    %15 = vector.load %arg7[%c0_13, %c0_14, %c0_15] : memref<1x32x128xf32, #tpu.memory_space<vmem>>, vector<1x32x128xf32>
    %16 = vector.shape_cast %15 : vector<1x32x128xf32> to vector<32x128xf32>
    %17 = vector.shape_cast %14 : vector<32x128xf32> to vector<1x32x128xf32>
    tpu.vector_store %arg7[%c0_13, %c0_14, %c0_15], %17 {strides = array<i32>} : memref<1x32x128xf32, #tpu.memory_space<vmem>>, vector<1x32x128xf32>,
    return
  }
  func.func @transform_0(%arg0: i32, %arg1: i32) -> (i32, i32, i32) {
    %c0_i32 = arith.constant 0 : i32
    %c0_i32_0 = arith.constant 0 : i32
    return %arg0, %c0_i32, %arg1 : i32, i32, i32
  }
  func.func @transform_1(%arg0: i32, %arg1: i32) -> (i32, i32) {
    %c0_i32 = arith.constant 0 : i32
    %c0_i32_0 = arith.constant 0 : i32
    return %c0_i32, %arg1 : i32, i32
  }
  func.func @transform_2(%arg0: i32, %arg1: i32) -> (i32, i32) {
    %c0_i32 = arith.constant 0 : i32
    %c0_i32_0 = arith.constant 0 : i32
    %c0_i32_1 = arith.constant 0 : i32
    return %c0_i32, %c0_i32_0 : i32, i32
  }
  func.func @transform_3(%arg0: i32, %arg1: i32) -> (i32, i32, i32) {
    %c0_i32 = arith.constant 0 : i32
    %c0_i32_0 = arith.constant 0 : i32
    %c0_i32_1 = arith.constant 0 : i32
    return %arg0, %c0_i32, %c0_i32_0 : i32, i32, i32
  }
  func.func @transform_4(%arg0: i32, %arg1: i32) -> (i32, i32) {
    %c0_i32 = arith.constant 0 : i32
    %c0_i32_0 = arith.constant 0 : i32
    %c0_i32_1 = arith.constant 0 : i32
    return %c0_i32, %c0_i32_0 : i32, i32
  }
  func.func @transform_5(%arg0: i32, %arg1: i32) -> (i32, i32, i32) {
    %c0_i32 = arith.constant 0 : i32
    %c0_i32_0 = arith.constant 0 : i32
    return %arg0, %c0_i32, %arg1 : i32, i32, i32
  }
}

</mosaic_0001>

<llo_original>
// kernel: tpu_custom_call.1
$region0: #{tpu_custom_call.1}
  #allocation0 [shape = 'u32[]', space=smem, size = 0x4, offset = 0x4, fixed_abs, tag = 'smem constant byte address 0x4 - core index']
  #allocation1 [shape = 'u32[144,128]{1,0:T(1,128)}', space=vmem, size = 0x12000, scoped, tag = 'internal scratch']
  %s0 = inlined_call_operand.hbm [shape: f32[2,32,256], index: 0, kind: input, shape index: {}]
  %s1 = inlined_call_operand.hbm [shape: f32[56,256], index: 1, kind: input, shape index: {}]
  %s2 = inlined_call_operand.vmem [shape: bf16[32,32], index: 2, kind: input, shape index: {}]
  %s3 = inlined_call_operand.hbm [shape: f32[2,32,56], index: 3, kind: input, shape index: {}]
  %s4 = inlined_call_operand.vmem [shape: f32[32,1], index: 4, kind: input, shape index: {}]
  %s5 = inlined_call_operand.hbm [shape: f32[2,32,256], index: 5, kind: output, shape index: {}]
  %s6 = sld [smem:[#allocation0]]
  $region65: #{tpu_custom_call.1} parent=0
    _
  %s8 = ssub.s32 1, %s6
  %s9 = scalar_select 0, %s8, %s6
  $region1: #{tpu_custom_call.1} parent=0
    #allocation2 [shape = 'u8[32768]{0}', space=vmem, size = 0x8000, scoped, tag = 'input window, operand 0']
    #allocation3 [shape = 's32[2]{0}', space=sflag, size = 0x8, scoped, tag = 'scoped memory for tpu_custom_call.1']
    #allocation4 [shape = 's32[2]{0}', space=sflag, size = 0x8, scoped, tag = 'scoped memory for tpu_custom_call.1']
    #allocation5 [shape = 'u8[57344]{0}', space=vmem, size = 0xe000, scoped, tag = 'input window, operand 1']
    #allocation6 [shape = 's32[2]{0}', space=sflag, size = 0x8, scoped, tag = 'scoped memory for tpu_custom_call.1']
    #allocation7 [shape = 'u8[32768]{0}', space=vmem, size = 0x8000, scoped, tag = 'input window, operand 3']
    #allocation8 [shape = 'u8[32768]{0}', space=vmem, size = 0x8000, scoped, tag = 'output window, operand 0']
    %10 = vsyncpa [#allocation3], 0
    %s11 = scalar_lea.sflag [#allocation3], 1
    %12 = vsyncpa %s11, 0
    %13 = vsyncpa [#allocation6], 0
    %s14 = scalar_lea.sflag [#allocation6], 1
    %15 = vsyncpa %s14, 0
    %16 = vsyncpa [#allocation4], 0
    %s17 = scalar_lea.sflag [#allocation4], 1
    %18 = vsyncpa %s17, 0
    loop: start=0, step=1, limit=6
    $region2: #{tpu_custom_call.1} parent=1 // loop_pre_header
      _
    $region3: #{tpu_custom_call.1} parent=1 // loop_header
      %s20 = sphi 0, %s24
      %p21 = scmp.ge.s32.totalorder %s20, 6
      %s27 = sphi 0, %s39
      %s28 = sphi 0, %s35
      %s29 = sphi 0, %s27
      %s30 = sphi 0, %s28
      %s31 = sphi 0, %s29
      %s32 = sphi 0, %s30
      %s44 = sphi 0, %s46
      %s47 = sphi 0, %s44
      %s48 = sphi 0, %s47
      %s64 = sphi 0, %s48
      %s70 = sphi 0, %s72
      %s73 = sphi 0, %s70
      %s74 = sphi 0, %s73
      %s90 = sphi 0, %s74
      %s94 = sphi 0, %s94
      %s96 = sphi 0, %s94
      %s97 = sphi 0, %s96
      %s111 = sphi 0, %s97
      %s117 = sphi 0, %s119
      %s120 = sphi 0, %s117
      %s121 = sphi 0, %s120
      %s137 = sphi 0, %s121
      %s141 = sphi 0, %s141
      %s143 = sphi 0, %s141
      %s144 = sphi 0, %s143
      %s158 = sphi 0, %s144
      %s166 = sphi 0, %s168
      %s169 = sphi 0, %s166
      %s170 = sphi 0, %s169
      %s186 = sphi 0, %s170
    $region4: #{tpu_custom_call.1} parent=1 // loop_header_branch
      %23 = sbr.rel (%p21) target = $region8
    $region5: #{tpu_custom_call.1} parent=1 // loop_body
      %s25 = ssub.s32 %s20, 1
      %s26 = ssub.s32 %s20, 2
      %s33 = sadd.s32 1, %s28
      %p34 = scmp.ge.s32.totalorder %s33, 2
      %s35 = scalar_select %p34, 0, %s33
      %s36 = sadd.s32 1, %s27
      %s37 = scalar_select %p34, %s36, %s27
      %p38 = scmp.ge.s32.totalorder %s37, 2
      %s39 = scalar_select %p38, 0, %s37
      %s40 = ssub.s32 %s27, %s39
      %s41 = ssub.s32 %s28, %s35
      %s42 = sor.u32 %s40, %s41
      %p43 = scmp.eq.s32.totalorder %s42, 0
      %s45 = sadd.s32 %s44, 1
      %s46 = scalar_select %p43, %s44, %s45
      %p49 = pneg %p43
      %p50 = scmp.eq.s32.totalorder %s20, 3
      %p51 = por %p49, %p50
      %p52 = scmp.ne.s32.totalorder %s44, %s47
      %p53 = scmp.eq.s32.totalorder %s20, 0
      %p54 = por %p52, %p53
      %p55 = scmp.ne.s32.totalorder %s44, %s47
      %p56 = scmp.eq.s32.totalorder %s25, 3
      %p57 = por %p55, %p56
      %p58 = scmp.ne.s32.totalorder %s47, %s48
      %p59 = scmp.eq.s32.totalorder %s25, 0
      %p60 = por %p58, %p59
      %p61 = scmp.ne.s32.totalorder %s47, %s48
      %p62 = scmp.eq.s32.totalorder %s26, 3
      %p63 = por %p61, %p62
      %p65 = scmp.ne.s32.totalorder %s48, %s64
      %p66 = scmp.eq.s32.totalorder %s26, 0
      %p67 = por %p65, %p66
      %s68 = ssub.s32 %s28, %s35
      %p69 = scmp.eq.s32.totalorder %s68, 0
      %s71 = sadd.s32 %s70, 1
      %s72 = scalar_select %p69, %s70, %s71
      %p75 = pneg %p69
      %p76 = scmp.eq.s32.totalorder %s20, 3
      %p77 = por %p75, %p76
      %p78 = scmp.ne.s32.totalorder %s70, %s73
      %p79 = scmp.eq.s32.totalorder %s20, 0
      %p80 = por %p78, %p79
      %p81 = scmp.ne.s32.totalorder %s70, %s73
      %p82 = scmp.eq.s32.totalorder %s25, 3
      %p83 = por %p81, %p82
      %p84 = scmp.ne.s32.totalorder %s73, %s74
      %p85 = scmp.eq.s32.totalorder %s25, 0
      %p86 = por %p84, %p85
      %p87 = scmp.ne.s32.totalorder %s73, %s74
      %p88 = scmp.eq.s32.totalorder %s26, 3
      %p89 = por %p87, %p88
      %p91 = scmp.ne.s32.totalorder %s74, %s90
      %p92 = scmp.eq.s32.totalorder %s26, 0
      %p93 = por %p91, %p92
      %s95 = sadd.s32 %s94, 1
      %p98 = scmp.eq.s32.totalorder %s20, 3
      %p99 = scmp.ne.s32.totalorder %s94, %s96
      %p100 = scmp.eq.s32.totalorder %s20, 0
      %p101 = por %p99, %p100
      %p102 = scmp.ne.s32.totalorder %s94, %s96
      %p103 = scmp.eq.s32.totalorder %s25, 3
      %p104 = por %p102, %p103
      %p105 = scmp.ne.s32.totalorder %s96, %s97
      %p106 = scmp.eq.s32.totalorder %s25, 0
      %p107 = por %p105, %p106
      %p108 = scmp.ne.s32.totalorder %s96, %s97
      %p109 = scmp.eq.s32.totalorder %s26, 3
      %p110 = por %p108, %p109
      %p112 = scmp.ne.s32.totalorder %s97, %s111
      %p113 = scmp.eq.s32.totalorder %s26, 0
      %p114 = por %p112, %p113
      %s115 = ssub.s32 %s27, %s39
      %p116 = scmp.eq.s32.totalorder %s115, 0
      %s118 = sadd.s32 %s117, 1
      %s119 = scalar_select %p116, %s117, %s118
      %p122 = pneg %p116
      %p123 = scmp.eq.s32.totalorder %s20, 3
      %p124 = por %p122, %p123
      %p125 = scmp.ne.s32.totalorder %s117, %s120
      %p126 = scmp.eq.s32.totalorder %s20, 0
      %p127 = por %p125, %p126
      %p128 = scmp.ne.s32.totalorder %s117, %s120
      %p129 = scmp.eq.s32.totalorder %s25, 3
      %p130 = por %p128, %p129
      %p131 = scmp.ne.s32.totalorder %s120, %s121
      %p132 = scmp.eq.s32.totalorder %s25, 0
      %p133 = por %p131, %p132
      %p134 = scmp.ne.s32.totalorder %s120, %s121
      %p135 = scmp.eq.s32.totalorder %s26, 3
      %p136 = por %p134, %p135
      %p138 = scmp.ne.s32.totalorder %s121, %s137
      %p139 = scmp.eq.s32.totalorder %s26, 0
      %p140 = por %p138, %p139
      %s142 = sadd.s32 %s141, 1
      %p145 = scmp.eq.s32.totalorder %s20, 3
      %p146 = scmp.ne.s32.totalorder %s141, %s143
      %p147 = scmp.eq.s32.totalorder %s20, 0
      %p148 = por %p146, %p147
      %p149 = scmp.ne.s32.totalorder %s141, %s143
      %p150 = scmp.eq.s32.totalorder %s25, 3
      %p151 = por %p149, %p150
      %p152 = scmp.ne.s32.totalorder %s143, %s144
      %p153 = scmp.eq.s32.totalorder %s25, 0
      %p154 = por %p152, %p153
      %p155 = scmp.ne.s32.totalorder %s143, %s144
      %p156 = scmp.eq.s32.totalorder %s26, 3
      %p157 = por %p155, %p156
      %p159 = scmp.ne.s32.totalorder %s144, %s158
      %p160 = scmp.eq.s32.totalorder %s26, 0
      %p161 = por %p159, %p160
      %s162 = ssub.s32 %s27, %s39
      %s163 = ssub.s32 %s28, %s35
      %s164 = sor.u32 %s162, %s163
      %p165 = scmp.eq.s32.totalorder %s164, 0
      %s167 = sadd.s32 %s166, 1
      %s168 = scalar_select %p165, %s166, %s167
      %p171 = pneg %p165
      %p172 = scmp.eq.s32.totalorder %s20, 3
      %p173 = por %p171, %p172
      %p174 = scmp.ne.s32.totalorder %s166, %s169
      %p175 = scmp.eq.s32.totalorder %s20, 0
      %p176 = por %p174, %p175
      %p177 = scmp.ne.s32.totalorder %s166, %s169
      %p178 = scmp.eq.s32.totalorder %s25, 3
      %p179 = por %p177, %p178
      %p180 = scmp.ne.s32.totalorder %s169, %s170
      %p181 = scmp.eq.s32.totalorder %s25, 0
      %p182 = por %p180, %p181
      %p183 = scmp.ne.s32.totalorder %s169, %s170
      %p184 = scmp.eq.s32.totalorder %s26, 3
      %p185 = por %p183, %p184
      %p187 = scmp.ne.s32.totalorder %s170, %s186
      %p188 = scmp.eq.s32.totalorder %s26, 0
      %p189 = por %p187, %p188
      %p190 = scmp.le.s32.totalorder 1, %s20
      %p191 = scmp.lt.s32.totalorder %s20, 5
      %p192 = pnand %p190, %p191
      %p193 = pneg %p192
      // Predicated region
      $region9: #{tpu_custom_call.1} parent=5 // pred_check
        _
      $region10: #{tpu_custom_call.1} parent=5 // pred_check_branch
        %195 = sbr.rel (%p192) target = $region12
      $region11: #{tpu_custom_call.1} parent=5 // pred_region
        %s196 = ssub.s32 %s20, 1
        // Predicated region
        $region13: #{tpu_custom_call.1} parent=11 // pred_check
          %p197 = pneg %p107
        $region14: #{tpu_custom_call.1} parent=11 // pred_check_branch
          %199 = sbr.rel (%p197) target = $region16
        $region15: #{tpu_custom_call.1} parent=11 // pred_region
          _
        $region16: #{tpu_custom_call.1} parent=11 // pred_fallthru
          _
        // Predicated region
        $region17: #{tpu_custom_call.1} parent=11 // pred_check
          %p200 = pneg %p154
        $region18: #{tpu_custom_call.1} parent=11 // pred_check_branch
          %202 = sbr.rel (%p200) target = $region20
        $region19: #{tpu_custom_call.1} parent=11 // pred_region
          _
        $region20: #{tpu_custom_call.1} parent=11 // pred_fallthru
          _
      $region12: #{tpu_custom_call.1} parent=5 // pred_fallthru
        _
      %p203 = scmp.lt.s32.totalorder %s20, 4
      // Predicated region
      $region21: #{tpu_custom_call.1} parent=5 // pred_check
        %p204 = pneg %p203
      $region22: #{tpu_custom_call.1} parent=5 // pred_check_branch
        %206 = sbr.rel (%p204) target = $region24
      $region23: #{tpu_custom_call.1} parent=5 // pred_region
        // Predicated region
        $region25: #{tpu_custom_call.1} parent=23 // pred_check
          %p207 = pneg %p54
        $region26: #{tpu_custom_call.1} parent=23 // pred_check_branch
          %209 = sbr.rel (%p207) target = $region28
        $region27: #{tpu_custom_call.1} parent=23 // pred_region
          %s210 = sand.u32 %s44, 1
          %s211 = scalar_lea.sflag [#allocation3], %s210
          %s212 = sand.u32 %s44, 1
          %s213 = smul.addr %s212, 32
          %s214 = scalar_lea.vmem [#allocation2], %s213
          %s216 = ssub.s32 512, 512
          %217 = vsyncadd %s211, %s216
          %s218 = smul.addr %s27, 8
          %s219 = sadd.s32 %s28, %s218
          %s220 = smul.addr %s219, 128
          %s221 = scalar_lea.hbm %s0, %s220
          %s222 = sshll.u32 %s214, 4
          %s223 = int_to_ptr.vmem [resolvable:$true] %s222
          %228 = dma.hbm_to_vmem [thread:$0]  %s221, 512, %s223, %s211, 256, 128, 8
        $region28: #{tpu_custom_call.1} parent=23 // pred_fallthru
          _
        // Predicated region
        $region29: #{tpu_custom_call.1} parent=23 // pred_check
          %p229 = pneg %p80
        $region30: #{tpu_custom_call.1} parent=23 // pred_check_branch
          %231 = sbr.rel (%p229) target = $region32
        $region31: #{tpu_custom_call.1} parent=23 // pred_region
          %s232 = sand.u32 %s20, 1
          %s233 = scalar_lea.sflag [#allocation6], %s232
          %s234 = sand.u32 %s70, 1
          %s235 = smul.addr %s234, 56
          %s236 = scalar_lea.vmem [#allocation5], %s235
          %s238 = ssub.s32 896, 896
          %239 = vsyncadd %s233, %s238
          %s240 = smul.addr %s28, 128
          %s241 = scalar_lea.hbm %s1, %s240
          %s242 = sshll.u32 %s236, 4
          %s243 = int_to_ptr.vmem [resolvable:$true] %s242
          %248 = dma.hbm_to_vmem [thread:$0]  %s241, 896, %s243, %s233, 256, 128, 8
        $region32: #{tpu_custom_call.1} parent=23 // pred_fallthru
          _
        // Predicated region
        $region33: #{tpu_custom_call.1} parent=23 // pred_check
          %p249 = pneg %p127
        $region34: #{tpu_custom_call.1} parent=23 // pred_check_branch
          %251 = sbr.rel (%p249) target = $region36
        $region35: #{tpu_custom_call.1} parent=23 // pred_region
          %s252 = sand.u32 %s20, 1
          %s253 = scalar_lea.sflag [#allocation6], %s252
          %s254 = sand.u32 %s117, 1
          %s255 = smul.addr %s254, 32
          %s256 = scalar_lea.vmem [#allocation7], %s255
          %s258 = ssub.s32 512, 512
          %259 = vsyncadd %s253, %s258
          %s260 = smul.addr %s27, 4
          %s261 = smul.addr %s260, 128
          %s262 = scalar_lea.hbm %s3, %s261
          %s263 = sshll.u32 %s256, 4
          %s264 = int_to_ptr.vmem [resolvable:$true] %s263
          %269 = dma.hbm_to_vmem [thread:$0]  %s262, 512, %s264, %s253, 128, 128, 8
        $region36: #{tpu_custom_call.1} parent=23 // pred_fallthru
          _
      $region24: #{tpu_custom_call.1} parent=5 // pred_fallthru
        _
      %p270 = scmp.le.s32.totalorder 1, %s20
      %p271 = scmp.lt.s32.totalorder %s20, 5
      %p272 = pnand %p270, %p271
      %p273 = pneg %p272
      // Predicated region
      $region37: #{tpu_custom_call.1} parent=5 // pred_check
        _
      $region38: #{tpu_custom_call.1} parent=5 // pred_check_branch
        %275 = sbr.rel (%p272) target = $region40
      $region39: #{tpu_custom_call.1} parent=5 // pred_region
        %s276 = ssub.s32 %s20, 1
        %s277 = sand.u32 %s47, 1
        %s278 = scalar_lea.sflag [#allocation3], %s277
        %s279 = sand.u32 %s47, 1
        %s280 = smul.addr %s279, 32
        %s281 = scalar_lea.vmem [#allocation2], %s280
        // Predicated region
        $region41: #{tpu_custom_call.1} parent=39 // pred_check
          %p282 = pneg %p60
        $region42: #{tpu_custom_call.1} parent=39 // pred_check_branch
          %284 = sbr.rel (%p282) target = $region44
        $region43: #{tpu_custom_call.1} parent=39 // pred_region
          %285 = dma.done %s278, 512
        $region44: #{tpu_custom_call.1} parent=39 // pred_fallthru
          _
        %s286 = sand.u32 %s25, 1
        %s287 = scalar_lea.sflag [#allocation6], %s286
        %s288 = sand.u32 %s73, 1
        %s289 = smul.addr %s288, 56
        %s290 = scalar_lea.vmem [#allocation5], %s289
        // Predicated region
        $region45: #{tpu_custom_call.1} parent=39 // pred_check
          %p291 = pneg %p86
        $region46: #{tpu_custom_call.1} parent=39 // pred_check_branch
          %293 = sbr.rel (%p291) target = $region48
        $region47: #{tpu_custom_call.1} parent=39 // pred_region
          %294 = dma.done %s287, 896
        $region48: #{tpu_custom_call.1} parent=39 // pred_fallthru
          _
        %s295 = sand.u32 %s25, 1
        %s296 = scalar_lea.sflag [#allocation6], %s295
        %s297 = sand.u32 %s120, 1
        %s298 = smul.addr %s297, 32
        %s299 = scalar_lea.vmem [#allocation7], %s298
        // Predicated region
        $region49: #{tpu_custom_call.1} parent=39 // pred_check
          %p300 = pneg %p133
        $region50: #{tpu_custom_call.1} parent=39 // pred_check_branch
          %302 = sbr.rel (%p300) target = $region52
        $region51: #{tpu_custom_call.1} parent=39 // pred_region
          %303 = dma.done %s296, 512
        $region52: #{tpu_custom_call.1} parent=39 // pred_fallthru
          _
        %s304 = sand.u32 %s47, 1
        %s305 = scalar_lea.sflag [#allocation3], %s304
        %s306 = sand.u32 %s47, 1
        %s307 = smul.addr %s306, 32
        %s308 = scalar_lea.vmem [#allocation2], %s307
        %p309 = pneg %p60
        %p310 = pneg %p57
        %s311 = sand.u32 %s25, 1
        %s312 = scalar_lea.sflag [#allocation6], %s311
        %s313 = sand.u32 %s73, 1
        %s314 = smul.addr %s313, 56
        %s315 = scalar_lea.vmem [#allocation5], %s314
        %p316 = pneg %p86
        %p317 = pneg %p83
        %p318 = pneg %p107
        %p319 = pneg %p104
        %s320 = sand.u32 %s25, 1
        %s321 = scalar_lea.sflag [#allocation6], %s320
        %s322 = sand.u32 %s120, 1
        %s323 = smul.addr %s322, 32
        %s324 = scalar_lea.vmem [#allocation7], %s323
        %p325 = pneg %p133
        %p326 = pneg %p130
        %p327 = pneg %p154
        %p328 = pneg %p151
        %p329 = pneg %p182
        %p330 = pneg %p179
        %s331 = sand.u32 %s169, 1
        %s332 = scalar_lea.sflag [#allocation4], %s331
        %s333 = sand.u32 %s169, 1
        %s334 = smul.addr %s333, 32
        %s335 = scalar_lea.vmem [#allocation8], %s334
        %v337 = vld [vmem:[%s281] sm:$0xff]
        %v338 = vld [vmem:[%s281 + $0x8] sm:$0xff]
        %v339 = vld [vmem:[%s281 + $0x10] sm:$0xff]
        %v340 = vld [vmem:[%s281 + $0x18] sm:$0xff]
        %v341 = vpack.c.bf16 %v338, %v337
        %v342 = vpack.c.bf16 %v340, %v339
        %v343 = vld [vmem:[%s2] sm:$0xf]
        %v344 = vld [vmem:[%s2 + $0x4] sm:$0xf]
        %v345 = vld [vmem:[%s2 + $0x8] sm:$0xf]
        %v346 = vld [vmem:[%s2 + $0xc] sm:$0xf]
        %v347 = vld [vmem:[%s299] sm:$0xff]
        %v348 = vld [vmem:[%s299 + $0x8] sm:$0xff]
        %v349 = vld [vmem:[%s299 + $0x10] sm:$0xff]
        %v350 = vld [vmem:[%s299 + $0x18] sm:$0xff]
        %v351 = vld [vmem:[%s290] sm:$0xff]
        %v352 = vld [vmem:[%s290 + $0x8] sm:$0xff]
        %v353 = vld [vmem:[%s290 + $0x10] sm:$0xff]
        %v354 = vld [vmem:[%s290 + $0x18] sm:$0xff]
        %v355 = vld [vmem:[%s290 + $0x20] sm:$0xff]
        %v356 = vld [vmem:[%s290 + $0x28] sm:$0xff]
        %v357 = vld [vmem:[%s290 + $0x30] sm:$0xff]
        %vm358 = vcmask 457728
        %v360 = vsel %vm358, %v347, 0
        %v363 = vsel %vm358, %v348, 0
        %v366 = vsel %vm358, %v349, 0
        %v369 = vsel %vm358, %v350, 0
        %371 = vmatprep.subr.mxu0 0.0
        %372 = vmatpush1.msra.mxu0 0.0
        %373 = vmatprep.subr.mxu0 0.0
        %374 = vmatpush1.msra.mxu0 0.0
        %375 = vmatprep.subr.mxu0 0.0
        %376 = vmatpush1.msra.mxu0 0.0
        %377 = vmatprep.subr.mxu0 0.0
        %378 = vmatpush1.msra.mxu0 0.0
        %379 = vmatprep.subr.mxu0 0.0
        %380 = vmatpush1.msra.mxu0 0.0
        %381 = vmatprep.subr.mxu0 0.0
        %382 = vmatpush1.msra.mxu0 0.0
        %383 = vmatprep.subr.mxu0 0.0
        %384 = vmatpush1.msra.mxu0 0.0
        %385 = vmatprep.subr.mxu0 0.0
        %386 = vmatpush1.msra.mxu0 0.0
        %387 = vmatprep.subr.mxu0 0.0
        %388 = vmatpush1.msra.mxu0 0.0
        %389 = vmatprep.subr.mxu0 0.0
        %390 = vmatpush1.msra.mxu0 %v357
        %391 = vmatprep.subr.mxu0 0.0
        %392 = vmatpush1.msra.mxu0 %v356
        %393 = vmatprep.subr.mxu0 0.0
        %394 = vmatpush1.msra.mxu0 %v355
        %395 = vmatprep.subr.mxu0 0.0
        %396 = vmatpush1.msra.mxu0 %v354
        %397 = vmatprep.subr.mxu0 0.0
        %398 = vmatpush1.msra.mxu0 %v353
        %399 = vmatprep.subr.mxu0 0.0
        %400 = vmatpush1.msra.mxu0 %v352
        %401 = vmatprep.subr.mxu0 0.0
        %402 = vmatpush1.msra.mxu0 %v351
        %403 = vmatprep.subr.mxu0 0.0
        %404 = vmatpush2.msra.mxu0 0.0
        %405 = vmatprep.subr.mxu0 0.0
        %406 = vmatpush2.msra.mxu0 0.0
        %407 = vmatprep.subr.mxu0 0.0
        %408 = vmatpush2.msra.mxu0 0.0
        %409 = vmatprep.subr.mxu0 0.0
        %410 = vmatpush2.msra.mxu0 0.0
        %411 = vmatprep.subr.mxu0 0.0
        %412 = vmatpush2.msra.mxu0 0.0
        %413 = vmatprep.subr.mxu0 0.0
        %414 = vmatpush2.msra.mxu0 0.0
        %415 = vmatprep.subr.mxu0 0.0
        %416 = vmatpush2.msra.mxu0 0.0
        %417 = vmatprep.subr.mxu0 0.0
        %418 = vmatpush2.msra.mxu0 0.0
        %419 = vmatprep.subr.mxu0 0.0
        %420 = vmatpush2.msra.mxu0 0.0
        %421 = vmatprep.subr.mxu0 0.0
        %422 = vmatpush2.msra.mxu0 0.0
        %423 = vmatprep.subr.mxu0 0.0
        %424 = vmatpush2.msra.mxu0 0.0
        %425 = vmatprep.subr.mxu0 0.0
        %426 = vmatpush2.msra.mxu0 0.0
        %427 = vmatprep.subr.mxu0 0.0
        %428 = vmatpush2.msra.mxu0 0.0
        %429 = vmatprep.subr.mxu0 0.0
        %430 = vmatpush2.msra.mxu0 0.0
        %431 = vmatprep.subr.mxu0 0.0
        %432 = vmatpush2.msra.mxu0 0.0
        %433 = vmatprep.subr.mxu0 0.0
        %434 = vmatpush2.msra.mxu0 0.0
        %435 = vmatprep.mubr.f32.mxu0 0.0
        %436 = vmatmul.mubr.f32.gmra.mxu0 %v360
        %v437 = vpop.f32.mrf.mxu0
        %v438 = vadd.f32 0.0, %v437
        %v439 = vpop.f32.mrf.mxu0
        %440 = vmatprep.mubr.f32.mxu0 0.0
        %441 = vmatmul.mubr.f32.gmra.mxu0 %v363
        %v442 = vpop.f32.mrf.mxu0
        %v443 = vadd.f32 0.0, %v442
        %v444 = vpop.f32.mrf.mxu0
        %445 = vmatprep.mubr.f32.mxu0 0.0
        %446 = vmatmul.mubr.f32.gmra.mxu0 %v366
        %v447 = vpop.f32.mrf.mxu0
        %v448 = vadd.f32 0.0, %v447
        %v449 = vpop.f32.mrf.mxu0
        %450 = vmatprep.mubr.f32.mxu0 0.0
        %451 = vmatmul.mubr.f32.gmra.mxu0 %v369
        %v452 = vpop.f32.mrf.mxu0
        %v453 = vadd.f32 0.0, %v452
        %v454 = vpop.f32.mrf.mxu0
        %455 = vdwg.mxu0
        %v460 = vunpack.c.l.b16 %v343
        %v461 = vunpack.c.l.b16 %v344
        %v462 = vunpack.c.l.b16 %v345
        %v463 = vunpack.c.l.b16 %v346
        %v464 = vpack.c.b16 %v461, %v460
        %v465 = vpack.c.b16 %v463, %v462
        %vm466 = vcmask 261120
        %v468 = vsel %vm466, %v464, 0
        %v471 = vsel %vm466, %v465, 0
        %473 = vmatprep.subr.bf16.mxu0 0
        %474 = vmatpush1.bf16.msra.mxu0 0
        %475 = vmatprep.subr.bf16.mxu0 0
        %476 = vmatpush1.bf16.msra.mxu0 0
        %477 = vmatprep.subr.bf16.mxu0 0
        %478 = vmatpush1.bf16.msra.mxu0 0
        %479 = vmatprep.subr.bf16.mxu0 0
        %480 = vmatpush1.bf16.msra.mxu0 0
        %481 = vmatprep.subr.bf16.mxu0 0
        %482 = vmatpush1.bf16.msra.mxu0 0
        %483 = vmatprep.subr.bf16.mxu0 0
        %484 = vmatpush1.bf16.msra.mxu0 0
        %485 = vmatprep.subr.bf16.mxu0 0
        %486 = vmatpush1.bf16.msra.mxu0 %v342
        %487 = vmatprep.subr.bf16.mxu0 0
        %488 = vmatpush1.bf16.msra.mxu0 %v341
        %489 = vmatprep.subr.bf16.mxu0 0
        %490 = vmatpush2.bf16.msra.mxu0 0
        %491 = vmatprep.subr.bf16.mxu0 0
        %492 = vmatpush2.bf16.msra.mxu0 0
        %493 = vmatprep.subr.bf16.mxu0 0
        %494 = vmatpush2.bf16.msra.mxu0 0
        %495 = vmatprep.subr.bf16.mxu0 0
        %496 = vmatpush2.bf16.msra.mxu0 0
        %497 = vmatprep.subr.bf16.mxu0 0
        %498 = vmatpush2.bf16.msra.mxu0 0
        %499 = vmatprep.subr.bf16.mxu0 0
        %500 = vmatpush2.bf16.msra.mxu0 0
        %501 = vmatprep.subr.bf16.mxu0 0
        %502 = vmatpush2.bf16.msra.mxu0 0
        %503 = vmatprep.subr.bf16.mxu0 0
        %504 = vmatpush2.bf16.msra.mxu0 0
        %505 = vmatprep.mubr.bf16.mxu0 0
        %506 = vmatmul.mubr.bf16.gmra.mxu0 %v468
        %v507 = vpop.f32.mrf.mxu0
        %v508 = vadd.f32 %v438, %v507
        %v509 = vpop.f32.mrf.mxu0
        %v510 = vpop.f32.mrf.mxu0
        %v511 = vadd.f32 %v443, %v510
        %v512 = vpop.f32.mrf.mxu0
        %513 = vmatprep.mubr.bf16.mxu0 0
        %514 = vmatmul.mubr.bf16.gmra.mxu0 %v471
        %v515 = vpop.f32.mrf.mxu0
        %v516 = vadd.f32 %v448, %v515
        %v517 = vpop.f32.mrf.mxu0
        %v518 = vpop.f32.mrf.mxu0
        %v519 = vadd.f32 %v453, %v518
        %v520 = vpop.f32.mrf.mxu0
        %521 = vdwg.mxu0
        %v522 = vld [vmem:[%s4] sm:$0xff]
        %v523 = vld [vmem:[%s4 + $0x8] sm:$0xff]
        %v524 = vld [vmem:[%s4 + $0x10] sm:$0xff]
        %v525 = vld [vmem:[%s4 + $0x18] sm:$0xff]
        %527 = vset.pattern.permute.xlu0 0
        %528 = vperm.xlu0 %527, %v522
        %v529 = vpop.permute.xlu0 %528
        %532 = vset.pattern.permute.xlu0 0
        %533 = vperm.xlu0 %532, %v523
        %v534 = vpop.permute.xlu0 %533
        %537 = vset.pattern.permute.xlu0 0
        %538 = vperm.xlu0 %537, %v524
        %v539 = vpop.permute.xlu0 %538
        %542 = vset.pattern.permute.xlu0 0
        %543 = vperm.xlu0 %542, %v525
        %v544 = vpop.permute.xlu0 %543
        %v546 = vadd.f32 %v508, %v529
        %v547 = vadd.f32 %v511, %v534
        %v548 = vadd.f32 %v516, %v539
        %v549 = vadd.f32 %v519, %v544
        %v550 = vmax.f32 %v546, 0.0
        %v551 = vmax.f32 %v547, 0.0
        %v552 = vmax.f32 %v548, 0.0
        %v553 = vmax.f32 %v549, 0.0
        %554 = vst [vmem:[%s335] sm:$0xff] %v550
        %555 = vst [vmem:[%s335 + $0x8] sm:$0xff] %v551
        %556 = vst [vmem:[%s335 + $0x10] sm:$0xff] %v552
        %557 = vst [vmem:[%s335 + $0x18] sm:$0xff] %v553
        %s558 = sand.u32 %s169, 1
        %s559 = scalar_lea.sflag [#allocation4], %s558
        %s560 = sand.u32 %s169, 1
        %s561 = smul.addr %s560, 32
        %s562 = scalar_lea.vmem [#allocation8], %s561
        // Predicated region
        $region53: #{tpu_custom_call.1} parent=39 // pred_check
          %p563 = pneg %p179
        $region54: #{tpu_custom_call.1} parent=39 // pred_check_branch
          %565 = sbr.rel (%p563) target = $region56
        $region55: #{tpu_custom_call.1} parent=39 // pred_region
          %s567 = ssub.s32 512, 512
          %568 = vsyncadd %s559, %s567
          %s569 = smul.addr %s29, 8
          %s570 = sadd.s32 %s30, %s569
          %s571 = smul.addr %s570, 128
          %s572 = scalar_lea.hbm %s5, %s571
          %s573 = sshll.u32 %s562, 4
          %s574 = int_to_ptr.vmem [resolvable:$true] %s573
          %579 = dma.vmem_to_hbm [thread:$0]  %s574, 512, %s572, %s559, 128, 256, 8
        $region56: #{tpu_custom_call.1} parent=39 // pred_fallthru
          _
      $region40: #{tpu_custom_call.1} parent=5 // pred_fallthru
        _
      %p580 = scmp.le.s32.totalorder 2, %s20
      // Predicated region
      $region57: #{tpu_custom_call.1} parent=5 // pred_check
        %p581 = pneg %p580
      $region58: #{tpu_custom_call.1} parent=5 // pred_check_branch
        %583 = sbr.rel (%p581) target = $region60
      $region59: #{tpu_custom_call.1} parent=5 // pred_region
        %s584 = ssub.s32 %s20, 2
        // Predicated region
        $region61: #{tpu_custom_call.1} parent=59 // pred_check
          %p585 = pneg %p185
        $region62: #{tpu_custom_call.1} parent=59 // pred_check_branch
          %587 = sbr.rel (%p585) target = $region64
        $region63: #{tpu_custom_call.1} parent=59 // pred_region
          %s588 = sand.u32 %s170, 1
          %s589 = scalar_lea.sflag [#allocation4], %s588
          %s590 = sand.u32 %s170, 1
          %s591 = smul.addr %s590, 32
          %s592 = scalar_lea.vmem [#allocation8], %s591
          %593 = dma.done %s589, 512
        $region64: #{tpu_custom_call.1} parent=59 // pred_fallthru
          _
      $region60: #{tpu_custom_call.1} parent=5 // pred_fallthru
        _
    $region6: #{tpu_custom_call.1} parent=1 // loop_footer
      %s24 = sadd.s32 1, %s20
    $region7: #{tpu_custom_call.1} parent=1 // loop_footer_branch
      %19 = sbr.rel target = $region3
    $region8: #{tpu_custom_call.1} parent=1 // loop_exit
      _
    %594 = vsyncpa [#allocation3], 1
    %s595 = scalar_lea.sflag [#allocation3], 1
    %596 = vsyncpa %s595, 1
    %597 = vsyncpa [#allocation6], 1
    %s598 = scalar_lea.sflag [#allocation6], 1
    %599 = vsyncpa %s598, 1
    %600 = vsyncpa [#allocation4], 1
    %s601 = scalar_lea.sflag [#allocation4], 1
    %602 = vsyncpa %s601, 1

</llo_original>
